<compile_context>
chip_gen: v5e
topology: v5e:2x2
jax: 0.10.0
libtpu: 0.0.40
codegen_flags: <defaults>
</compile_context>

<pallas_src>
import functools
import math

import jax
import jax.numpy as jnp
from jax.experimental import pallas as pl
from jax.experimental.pallas import tpu as pltpu

EPS = 1e-5
_TILE_TARGET_BYTES = 8 * 1024 * 1024     # upper bound per streamed input block
_VMEM_HEADROOM = 8 * 1024 * 1024


# ----------------------------------------------------------------------------
# Small helpers (all trace-time Python).
# ----------------------------------------------------------------------------
def _vmem_capacity_bytes():
    try:
        cap = int(pltpu.get_tpu_info().vmem_capacity_bytes)
        if cap > 0:
            return cap
    except Exception:
        pass
    return 64 << 20   # conservative default (v7x per-TensorCore VMEM)


def _sublane_quantum(dtype):
    return max(8, 32 // jnp.dtype(dtype).itemsize)


def _tile_target_bytes(itemsize):
    """Largest streamed-tile size that keeps ~6 live tile-regions (in+out
    double-buffered plus f32 temporaries) inside VMEM on this generation."""
    cap = _vmem_capacity_bytes()
    elems = max(1, (cap - (24 << 20)) // (4 * itemsize + 8))
    return max(1 << 20, min(_TILE_TARGET_BYTES, elems * itemsize))


def _pick_tile(total, quantum, bytes_per_unit, target):
    """Largest multiple of `quantum` <= total fitting the byte target; prefers
    a nearby value that evenly divides `total` (avoids a ragged masked tile)."""
    units = max(1, target // max(1, bytes_per_unit))
    if units >= total:
        return total
    tile = max(quantum, (units // quantum) * quantum)
    tile = min(tile, total)
    cand, steps = tile, 0
    while cand >= quantum and steps < 64:
        if total % cand == 0:
            return cand
        cand -= quantum
        steps += 1
    return tile


def _fold_factor(rows, c):
    """Lane fold: put k consecutive rows side by side on the lane axis so the
    folded width k*c is a multiple of 128 (lane-dense loads / unmasked vst)."""
    if c % 128 == 0 or rows <= 0:
        return 1
    k = math.lcm(c, 128) // c
    if rows % k == 0:
        return k
    if c < 128:
        k2 = 128 // c
        if k2 > 1 and rows % k2 == 0:
            return k2
    return 1


def _compiler_params(semantics, vmem_bytes):
    cap = _vmem_capacity_bytes()
    limit = max(32 << 20, min(int(vmem_bytes), cap - (8 << 20)))
    return pltpu.CompilerParams(dimension_semantics=semantics,
                                vmem_limit_bytes=limit)


# ----------------------------------------------------------------------------
# Channel-last layout: x is a 2-D slab (rows, w), channel (lane-folded) on the
# lane axis, samples on sublanes.
# ----------------------------------------------------------------------------
def _stats_cl_kernel(x_ref, sum_ref, ssq_ref, *, rows, tile_rows, mask_rows):
    x = x_ref[...].astype(jnp.float32)                       # (tile_rows, w)

    def _write(xv):
        sum_ref[...] = jnp.sum(xv, axis=0, keepdims=True)[None]
        ssq_ref[...] = jnp.sum(xv * xv, axis=0, keepdims=True)[None]

    if not mask_rows:
        _write(x)
    else:
        i = pl.program_id(0)
        last = pl.num_programs(0) - 1

        @pl.when(i != last)
        def _():
            _write(x)

        @pl.when(i == last)
        def _():
            r = i * tile_rows + jax.lax.broadcasted_iota(jnp.int32, x.shape, 0)
            _write(jnp.where(r < rows, x, 0.0))


def _norm_cl_kernel(x_ref, scale_ref, shift_ref, o_ref):
    x = x_ref[...].astype(jnp.float32)
    o_ref[...] = (x * scale_ref[...] + shift_ref[...]).astype(o_ref.dtype)


def _single_cl_kernel(x_ref, gamma_ref, beta_ref, o_ref, *, k, c, count):
    # Whole (folded) slab resident in VMEM: stats + normalize in one HBM read.
    x = x_ref[...].astype(jnp.float32)                       # (r_f, w), w = k*c
    s = jnp.sum(x, axis=0, keepdims=True)                    # (1, w)
    sq = jnp.sum(x * x, axis=0, keepdims=True)
    # Cyclic all-reduce over the k lane groups (k is a power of two): after
    # log2(k) roll+add steps every lane holds the total of its channel.
    step = c
    while step < k * c:
        s = s + pltpu.roll(s, shift=step, axis=1)
        sq = sq + pltpu.roll(sq, shift=step, axis=1)
        step *= 2
    inv = 1.0 / count
    mean = s * inv
    var = jnp.maximum(sq * inv - mean * mean, 0.0)
    scale = gamma_ref[...] * jax.lax.rsqrt(var + EPS)        # gamma pre-tiled (1, w)
    shift = beta_ref[...] - mean * scale
    o_ref[...] = (x * scale + shift).astype(o_ref.dtype)


def _bn_channel_last(x2d, gamma, beta, single_pass):
    rows, c = x2d.shape
    dt = x2d.dtype
    itemsize = jnp.dtype(dt).itemsize

    k = _fold_factor(rows, c)
    w = k * c
    r_f = rows // k
    xs = x2d.reshape(r_f, w)                   # row-major contiguous => free reshape

    count = float(rows)
    in_bytes = rows * c * itemsize
    f32_bytes = rows * c * 4

    cap = _vmem_capacity_bytes()
    fast_limit = min(cap - (16 << 20), 100 << 20)
    fast_need = 2 * in_bytes + 3 * f32_bytes + (2 << 20)
    use_fast = (single_pass is not False) and (fast_need <= fast_limit)

    if use_fast:
        gamma_w = jnp.tile(jnp.asarray(gamma, jnp.float32), (k,)).reshape(1, w)
        beta_w = jnp.tile(jnp.asarray(beta, jnp.float32), (k,)).reshape(1, w)
        y = pl.pallas_call(
            functools.partial(_single_cl_kernel, k=k, c=c, count=count),
            out_shape=jax.ShapeDtypeStruct((r_f, w), dt),
            compiler_params=pltpu.CompilerParams(vmem_limit_bytes=fast_limit),
            cost_estimate=pl.CostEstimate(flops=5 * rows * c, transcendentals=c,
                                          bytes_accessed=2 * in_bytes),
        )(xs, gamma_w, beta_w)
        return y.reshape(rows, c)

    # -------- two-pass streamed path --------
    target = _tile_target_bytes(itemsize)
    quantum = _sublane_quantum(dt)
    tile_rows = _pick_tile(r_f, quantum, w * itemsize, target)
    n_tiles = pl.cdiv(r_f, tile_rows)
    mask_rows = (r_f % tile_rows) != 0
    tile_bytes = tile_rows * w * itemsize
    tile_f32 = tile_rows * w * 4

    # Pass 1 (stats): one partial (sum, sumsq) block per tile -> the grid axis
    # is fully "parallel" (megacore) and there is no cross-step carry.
    sums, ssqs = pl.pallas_call(
        functools.partial(_stats_cl_kernel, rows=r_f, tile_rows=tile_rows,
                          mask_rows=mask_rows),
        grid=(n_tiles,),
        in_specs=[pl.BlockSpec((tile_rows, w), lambda i: (i, 0))],
        out_specs=(pl.BlockSpec((1, 1, w), lambda i: (i, 0, 0)),
                   pl.BlockSpec((1, 1, w), lambda i: (i, 0, 0))),
        out_shape=(jax.ShapeDtypeStruct((n_tiles, 1, w), jnp.float32),
                   jax.ShapeDtypeStruct((n_tiles, 1, w), jnp.float32)),
        compiler_params=_compiler_params(("parallel",),
                                         2 * tile_bytes + 2 * tile_f32 + _VMEM_HEADROOM),
        cost_estimate=pl.CostEstimate(flops=3 * rows * c, transcendentals=0,
                                      bytes_accessed=in_bytes),
    )(xs)

    # Tiny XLA glue: fold tile partials and the k lane groups back to channels.
    sum_c = jnp.sum(sums.reshape(n_tiles, k, c), axis=(0, 1))
    ssq_c = jnp.sum(ssqs.reshape(n_tiles, k, c), axis=(0, 1))
    mean = sum_c / count
    var = jnp.maximum(ssq_c / count - mean * mean, 0.0)
    scale_c = jnp.asarray(gamma, jnp.float32) * jax.lax.rsqrt(var + EPS)
    shift_c = jnp.asarray(beta, jnp.float32) - mean * scale_c
    scale = jnp.tile(scale_c, (k,)).reshape(1, w)
    shift = jnp.tile(shift_c, (k,)).reshape(1, w)

    # Pass 2 (normalize): y = x*scale + shift.
    y = pl.pallas_call(
        _norm_cl_kernel,
        grid=(n_tiles,),
        in_specs=[pl.BlockSpec((tile_rows, w), lambda i: (i, 0)),
                  pl.BlockSpec((1, w), lambda i: (0, 0)),
                  pl.BlockSpec((1, w), lambda i: (0, 0))],
        out_specs=pl.BlockSpec((tile_rows, w), lambda i: (i, 0)),
        out_shape=jax.ShapeDtypeStruct((r_f, w), dt),
        compiler_params=_compiler_params(("parallel",),
                                         4 * tile_bytes + 2 * tile_f32 + _VMEM_HEADROOM),
        cost_estimate=pl.CostEstimate(flops=2 * rows * c, transcendentals=0,
                                      bytes_accessed=2 * in_bytes),
    )(xs, scale, shift)
    return y.reshape(rows, c)


# ----------------------------------------------------------------------------
# (N, C, M) layout handled natively (no wrapper transposes): channel on
# sublanes, points on lanes, several batch samples folded into one block.
# ----------------------------------------------------------------------------
def _stats_cm_kernel(x_ref, sum_ref, ssq_ref, *, n, m, tile_n, tile_m,
                     mask_n, mask_m):
    i = pl.program_id(0)
    j = pl.program_id(1)

    @pl.when(j == 0)
    def _():
        sum_ref[...] = jnp.zeros_like(sum_ref)
        ssq_ref[...] = jnp.zeros_like(ssq_ref)

    x = x_ref[...].astype(jnp.float32)                 # (tile_n, c, tile_m)

    def _accum(xv):
        s = jnp.sum(jnp.sum(xv, axis=0), axis=1, keepdims=True)        # (c, 1)
        q = jnp.sum(jnp.sum(xv * xv, axis=0), axis=1, keepdims=True)
        sum_ref[...] += s[None]
        ssq_ref[...] += q[None]

    if not (mask_n or mask_m):
        _accum(x)
    else:
        conds = []
        if mask_n:
            conds.append(i == pl.num_programs(0) - 1)
        if mask_m:
            conds.append(j == pl.num_programs(1) - 1)
        edge = conds[0] if len(conds) == 1 else jnp.logical_or(conds[0], conds[1])

        @pl.when(jnp.logical_not(edge))
        def _():
            _accum(x)

        @pl.when(edge)
        def _():
            xv = x
            if mask_n:
                rn = i * tile_n + jax.lax.broadcasted_iota(jnp.int32, x.shape, 0)
                xv = jnp.where(rn < n, xv, 0.0)
            if mask_m:
                cm = j * tile_m + jax.lax.broadcasted_iota(jnp.int32, x.shape, 2)
                xv = jnp.where(cm < m, xv, 0.0)
            _accum(xv)


def _norm_cm_kernel(x_ref, scale_ref, shift_ref, o_ref):
    x = x_ref[...].astype(jnp.float32)                 # (tile_n, c, tile_m)
    y = x * scale_ref[...][None] + shift_ref[...][None]
    o_ref[...] = y.astype(o_ref.dtype)


def _single_cm_kernel(x_ref, gamma_ref, beta_ref, o_ref, *, count):
    x = x_ref[...].astype(jnp.float32)                 # (n, c, m)
    s = jnp.sum(jnp.sum(x, axis=0), axis=1, keepdims=True)[None]       # (1, c, 1)
    sq = jnp.sum(jnp.sum(x * x, axis=0), axis=1, keepdims=True)[None]
    inv = 1.0 / count
    mean = s * inv
    var = jnp.maximum(sq * inv - mean * mean, 0.0)
    scale = gamma_ref[...][None] * jax.lax.rsqrt(var + EPS)            # (1, c, 1)
    shift = beta_ref[...][None] - mean * scale
    o_ref[...] = (x * scale + shift).astype(o_ref.dtype)


def _bn_channel_middle(x, gamma, beta, single_pass):
    n, c, m = x.shape
    dt = x.dtype
    itemsize = jnp.dtype(dt).itemsize
    count = float(n * m)
    in_bytes = n * c * m * itemsize
    f32_bytes = n * c * m * 4

    cap = _vmem_capacity_bytes()
    fast_limit = min(cap - (16 << 20), 100 << 20)
    fast_need = 2 * in_bytes + 3 * f32_bytes + (2 << 20)
    use_fast = (single_pass is not False) and (fast_need <= fast_limit)

    if use_fast:
        g = jnp.asarray(gamma, jnp.float32).reshape(c, 1)
        b = jnp.asarray(beta, jnp.float32).reshape(c, 1)
        return pl.pallas_call(
            functools.partial(_single_cm_kernel, count=count),
            out_shape=jax.ShapeDtypeStruct((n, c, m), dt),
            compiler_params=pltpu.CompilerParams(vmem_limit_bytes=fast_limit),
            cost_estimate=pl.CostEstimate(flops=5 * n * c * m, transcendentals=c,
                                          bytes_accessed=2 * in_bytes),
        )(x, g, b)

    # -------- two-pass streamed path --------
    target = _tile_target_bytes(itemsize)
    per_sample = c * m * itemsize
    if per_sample <= target:
        tile_m = m
        tile_n = _pick_tile(n, 1, per_sample, target)    # fold samples into one block
    else:
        tile_n = 1
        tile_m = _pick_tile(m, 128, c * itemsize, target)
    nt_n = pl.cdiv(n, tile_n)
    nt_m = pl.cdiv(m, tile_m)
    mask_n = (n % tile_n) != 0
    mask_m = (m % tile_m) != 0
    tile_bytes = tile_n * c * tile_m * itemsize
    tile_f32 = tile_n * c * tile_m * 4

    sums, ssqs = pl.pallas_call(
        functools.partial(_stats_cm_kernel, n=n, m=m, tile_n=tile_n, tile_m=tile_m,
                          mask_n=mask_n, mask_m=mask_m),
        grid=(nt_n, nt_m),
        in_specs=[pl.BlockSpec((tile_n, c, tile_m), lambda i, j: (i, 0, j))],
        out_specs=(pl.BlockSpec((1, c, 1), lambda i, j: (i, 0, 0)),
                   pl.BlockSpec((1, c, 1), lambda i, j: (i, 0, 0))),
        out_shape=(jax.ShapeDtypeStruct((nt_n, c, 1), jnp.float32),
                   jax.ShapeDtypeStruct((nt_n, c, 1), jnp.float32)),
        compiler_params=_compiler_params(("parallel", "arbitrary"),
                                         2 * tile_bytes + 2 * tile_f32 + _VMEM_HEADROOM),
        cost_estimate=pl.CostEstimate(flops=3 * n * c * m, transcendentals=0,
                                      bytes_accessed=in_bytes),
    )(x)

    sum_c = jnp.sum(sums[:, :, 0], axis=0)
    ssq_c = jnp.sum(ssqs[:, :, 0], axis=0)
    mean = sum_c / count
    var = jnp.maximum(ssq_c / count - mean * mean, 0.0)
    scale = (jnp.asarray(gamma, jnp.float32) * jax.lax.rsqrt(var + EPS)).reshape(c, 1)
    shift = jnp.asarray(beta, jnp.float32).reshape(c, 1) - mean.reshape(c, 1) * scale

    y = pl.pallas_call(
        _norm_cm_kernel,
        grid=(nt_n, nt_m),
        in_specs=[pl.BlockSpec((tile_n, c, tile_m), lambda i, j: (i, 0, j)),
                  pl.BlockSpec((c, 1), lambda i, j: (0, 0)),
                  pl.BlockSpec((c, 1), lambda i, j: (0, 0))],
        out_specs=pl.BlockSpec((tile_n, c, tile_m), lambda i, j: (i, 0, j)),
        out_shape=jax.ShapeDtypeStruct((n, c, m), dt),
        compiler_params=_compiler_params(("parallel", "parallel"),
                                         4 * tile_bytes + 2 * tile_f32 + _VMEM_HEADROOM),
        cost_estimate=pl.CostEstimate(flops=2 * n * c * m, transcendentals=0,
                                      bytes_accessed=2 * in_bytes),
    )(x, scale, shift)
    return y


# ----------------------------------------------------------------------------
# Public wrapper matching BatchNorm(feature_dim).forward(x) in training mode.
# ----------------------------------------------------------------------------
@functools.partial(jax.jit, static_argnames=("feature_dim", "single_pass"))
def batchnorm_forward(x, gamma, beta, *, feature_dim, single_pass=None):
    if x.ndim == 3 and x.shape[-1] == feature_dim:
        # (N, M, C): PyTorch permute path; flatten rows (free), channel last.
        n, m, c = x.shape
        y2d = _bn_channel_last(x.reshape(n * m, c), gamma, beta, single_pass)
        return y2d.reshape(n, m, c)
    elif x.ndim == 3:
        # (N, C, M): handled natively, no transposes.
        assert x.shape[1] == feature_dim
        return _bn_channel_middle(x, gamma, beta, single_pass)
    else:
        # (N, C)
        assert x.ndim == 2 and x.shape[1] == feature_dim
        return _bn_channel_last(x, gamma, beta, single_pass)


# ----------------------------------------------------------------------------
# Pure-JAX reference mirroring nn.BatchNorm1d training-mode forward.
# ----------------------------------------------------------------------------
def _reference(x, gamma, beta, feature_dim):
    if x.ndim == 3 and x.shape[-1] == feature_dim:
        mean = jnp.mean(x, axis=(0, 1))
        var = jnp.mean((x - mean) ** 2, axis=(0, 1))
        return (x - mean) / jnp.sqrt(var + EPS) * gamma + beta
    elif x.ndim == 3:
        mean = jnp.mean(x, axis=(0, 2), keepdims=True)
        var = jnp.mean((x - mean) ** 2, axis=(0, 2), keepdims=True)
        return ((x - mean) / jnp.sqrt(var + EPS) * gamma[None, :, None]
                + beta[None, :, None])
    else:
        mean = jnp.mean(x, axis=0)
        var = jnp.mean((x - mean) ** 2, axis=0)
        return (x - mean) / jnp.sqrt(var + EPS) * gamma + beta


if __name__ == "__main__":
    feature_dim = 32
    key = jax.random.PRNGKey(0)
    kx1, kx2, kx3, kg, kb = jax.random.split(key, 5)

    # nn.BatchNorm1d init is weight=1, bias=0; perturb so the affine is exercised.
    gamma = 1.0 + 0.1 * jax.random.normal(kg, (feature_dim,), dtype=jnp.float32)
    beta = 0.1 * jax.random.normal(kb, (feature_dim,), dtype=jnp.float32)

    x_nmc = jax.random.normal(kx1, (2, 8, feature_dim), dtype=jnp.float32)   # (N, M, C)
    x_ncm = jax.random.normal(kx2, (2, feature_dim, 16), dtype=jnp.float32)  # (N, C, M)
    x_nc = jax.random.normal(kx3, (4, feature_dim), dtype=jnp.float32)       # (N, C)

    for x in (x_nmc, x_ncm, x_nc):
        y_ref = _reference(x, gamma, beta, feature_dim)
        # Exercise both the single-pass VMEM-resident path (auto) and the
        # two-pass streamed path (forced off).
        for sp in (None, False):
            y = jax.block_until_ready(
                batchnorm_forward(x, gamma, beta, feature_dim=feature_dim,
                                  single_pass=sp))
            assert y.shape == x.shape
            assert jnp.allclose(y, y_ref, atol=1e-4, rtol=1e-4), (x.shape, sp)

    print("KERNEL_OK")
</pallas_src>

<mosaic_0001>
module attributes {stable_mosaic.version = 11 : i64} {
  func.func @_single_cl_kernel(%arg0: memref<4x128xf32, #tpu.memory_space<vmem>>, %arg1: memref<1x128xf32, #tpu.memory_space<vmem>>, %arg2: memref<1x128xf32, #tpu.memory_space<vmem>>, %arg3: memref<4x128xf32, #tpu.memory_space<vmem>>) attributes {dimension_semantics = [], scalar_prefetch = 0 : i64, scratch_operands = 0 : i64, tpu.core_type = #tpu.core_type<tc>} {
    %c0 = arith.constant 0 : index
    %c0_0 = arith.constant 0 : index
    %0 = vector.load %arg0[%c0, %c0_0] : memref<4x128xf32, #tpu.memory_space<vmem>>, vector<4x128xf32>
    %cst = arith.constant dense<0.000000e+00> : vector<128xf32>
    %1 = vector.multi_reduction <add>, %0, %cst [0] : vector<4x128xf32> to vector<128xf32>
    %2 = vector.shape_cast %1 : vector<128xf32> to vector<1x128xf32>
    %3 = arith.mulf %0, %0 : vector<4x128xf32>
    %cst_1 = arith.constant dense<0.000000e+00> : vector<128xf32>
    %4 = vector.multi_reduction <add>, %3, %cst_1 [0] : vector<4x128xf32> to vector<128xf32>
    %5 = vector.shape_cast %4 : vector<128xf32> to vector<1x128xf32>
    %c32_i32 = arith.constant 32 : i32
    %6 = tpu.dynamic_rotate %2 by %c32_i32 dim 1 : vector<1x128xf32>, i32 -> vector<1x128xf32>
    %7 = arith.addf %2, %6 : vector<1x128xf32>
    %c32_i32_2 = arith.constant 32 : i32
    %8 = tpu.dynamic_rotate %5 by %c32_i32_2 dim 1 : vector<1x128xf32>, i32 -> vector<1x128xf32>
    %9 = arith.addf %5, %8 : vector<1x128xf32>
    %c64_i32 = arith.constant 64 : i32
    %10 = tpu.dynamic_rotate %7 by %c64_i32 dim 1 : vector<1x128xf32>, i32 -> vector<1x128xf32>
    %11 = arith.addf %7, %10 : vector<1x128xf32>
    %c64_i32_3 = arith.constant 64 : i32
    %12 = tpu.dynamic_rotate %9 by %c64_i32_3 dim 1 : vector<1x128xf32>, i32 -> vector<1x128xf32>
    %13 = arith.addf %9, %12 : vector<1x128xf32>
    %cst_4 = arith.constant 6.250000e-02 : f32
    %14 = vector.broadcast %cst_4 : f32 to vector<1x128xf32>
    %15 = arith.mulf %11, %14 : vector<1x128xf32>
    %cst_5 = arith.constant 6.250000e-02 : f32
    %16 = vector.broadcast %cst_5 : f32 to vector<1x128xf32>
    %17 = arith.mulf %13, %16 : vector<1x128xf32>
    %18 = arith.mulf %15, %15 : vector<1x128xf32>
    %19 = arith.subf %17, %18 : vector<1x128xf32>
    %cst_6 = arith.constant 0.000000e+00 : f32
    %20 = vector.broadcast %cst_6 : f32 to vector<1x128xf32>
    %21 = arith.maximumf %19, %20 : vector<1x128xf32>
    %c0_7 = arith.constant 0 : index
    %c0_8 = arith.constant 0 : index
    %22 = vector.load %arg1[%c0_7, %c0_8] : memref<1x128xf32, #tpu.memory_space<vmem>>, vector<1x128xf32>
    %cst_9 = arith.constant 9.99999974E-6 : f32
    %23 = vector.broadcast %cst_9 : f32 to vector<1x128xf32>
    %24 = arith.addf %21, %23 : vector<1x128xf32>
    %25 = math.rsqrt %24 : vector<1x128xf32>
    %26 = arith.mulf %22, %25 : vector<1x128xf32>
    %c0_10 = arith.constant 0 : index
    %c0_11 = arith.constant 0 : index
    %27 = vector.load %arg2[%c0_10, %c0_11] : memref<1x128xf32, #tpu.memory_space<vmem>>, vector<1x128xf32>
    %28 = arith.mulf %15, %26 : vector<1x128xf32>
    %29 = arith.subf %27, %28 : vector<1x128xf32>
    %30 = vector.broadcast %26 : vector<1x128xf32> to vector<4x128xf32>
    %31 = arith.mulf %0, %30 : vector<4x128xf32>
    %32 = vector.broadcast %29 : vector<1x128xf32> to vector<4x128xf32>
    %33 = arith.addf %31, %32 : vector<4x128xf32>
    %c0_12 = arith.constant 0 : index
    %c0_13 = arith.constant 0 : index
    %34 = vector.load %arg3[%c0_12, %c0_13] : memref<4x128xf32, #tpu.memory_space<vmem>>, vector<4x128xf32>
    tpu.vector_store %arg3[%c0_12, %c0_13], %33 {strides = array<i32>} : memref<4x128xf32, #tpu.memory_space<vmem>>, vector<4x128xf32>,
    return
  }
}

</mosaic_0001>

<llo_original>
// kernel: tile.14
$region0: #{tile.14}
  %s0 = inlined_call_operand.vmem [shape: f32[4,32], index: 0, kind: input, shape index: {}]
  %s1 = inlined_call_operand.vmem [shape: f32[1,128], index: 1, kind: output, shape index: {}]
  $region1: #{tile.14} parent=0
    #allocation0 [shape = 'u8[4096]{0}', space=vmem, size = 0x1000, scoped, tag = 'scoped mem for output reshape']
    #allocation1 [shape = 'u8[4096]{0}', space=vmem, size = 0x1000, scoped, tag = 'scoped mem for input reshape']
    %s3 = ssub.s32 16, 1
    %v4 = vld [vmem:[%s0] sm:%s3]
    %5 = vst [vmem:[#allocation1] sm:%s3] %v4
    %v6 = vld [vmem:[#allocation1] sm:$0x1]
    %vm7 = vcmask 261120
    %8 = vst.msk [vmem:[#allocation0] sm:$0x1] %vm7, %v6
    %s9 = scalar_lea.vmem [#allocation1], 3
    %v10 = vld [vmem:[%s9] sm:$0x1]
    %11 = vrot.lane.b32.xlu0 %v10, 96
    %v12 = vpop.permute.xlu0 %11
    %vm13 = vcmask 1048320
    %14 = vst.msk [vmem:[#allocation0] sm:$0x1] %vm13, %v12
    %s15 = scalar_lea.vmem [#allocation1], 2
    %v16 = vld [vmem:[%s15] sm:$0x1]
    %17 = vrot.lane.b32.xlu0 %v16, 64
    %v18 = vpop.permute.xlu0 %17
    %vm19 = vcmask 785920
    %20 = vst.msk [vmem:[#allocation0] sm:$0x1] %vm19, %v18
    %s21 = scalar_lea.vmem [#allocation1], 1
    %v22 = vld [vmem:[%s21] sm:$0x1]
    %23 = vrot.lane.b32.xlu0 %v22, 32
    %v24 = vpop.permute.xlu0 %23
    %vm25 = vcmask 523520
    %26 = vst.msk [vmem:[#allocation0] sm:$0x1] %vm25, %v24
    %s28 = ssub.s32 2, 1
    %v29 = vld [vmem:[#allocation0] sm:%s28]
    %s31 = ssub.s32 2, 1
    %32 = vst [vmem:[%s1] sm:%s31] %v29

// kernel: tile.13
$region0: #{tile.13}
  #allocation0 [shape = 's32[1]{0}', space=sflag, size = 0x4, scoped, tag = 'scoped memory for tile.13']
  %s0 = inlined_call_operand.vmem [shape: f32[32], index: 0, kind: input, shape index: {}]
  %s1 = inlined_call_operand.vmem [shape: f32[4,32], index: 1, kind: output, shape index: {}]
  // Predicated region
  $region2: #{tile.13} parent=0 // pred_check
    _
  $region3: #{tile.13} parent=0 // pred_check_branch
    %3 = sbr.rel (0) target = $region5
  $region4: #{tile.13} parent=0 // pred_region
    _
  $region5: #{tile.13} parent=0 // pred_fallthru
    _
  %v4 = vld [vmem:[%s0] ss:$0 sm:$0xff]
  %5 = vst [vmem:[%s1] sm:$0xf] %v4

// kernel: batchnorm_forward.1
$region0: #{batchnorm_forward.1}
  #allocation0 [shape = 'u32[]', space=smem, size = 0x4, offset = 0x4, fixed_abs, tag = 'smem constant byte address 0x4 - core index']
  #allocation1 [shape = 'u32[72,128]{1,0:T(1,128)}', space=vmem, size = 0x9000, scoped, tag = 'internal scratch']
  %s0 = inlined_call_operand.vmem [shape: f32[4,128], index: 0, kind: input, shape index: {}]
  %s1 = inlined_call_operand.vmem [shape: f32[1,128], index: 1, kind: input, shape index: {}]
  %s2 = inlined_call_operand.vmem [shape: f32[1,128], index: 2, kind: input, shape index: {}]
  %s3 = inlined_call_operand.vmem [shape: f32[4,128], index: 3, kind: output, shape index: {}]
  %s4 = sld [smem:[#allocation0]]
  $region22: #{batchnorm_forward.1} parent=0
    _
  %s6 = ssub.s32 1, %s4
  %s7 = scalar_select 0, %s6, %s4
  // Predicated region
  $region2: #{batchnorm_forward.1} parent=0 // pred_check
    _
  $region3: #{batchnorm_forward.1} parent=0 // pred_check_branch
    %9 = sbr.rel (0) target = $region5
  $region4: #{batchnorm_forward.1} parent=0 // pred_region
    _
  $region5: #{batchnorm_forward.1} parent=0 // pred_fallthru
    _
  // Predicated region
  $region6: #{batchnorm_forward.1} parent=0 // pred_check
    _
  $region7: #{batchnorm_forward.1} parent=0 // pred_check_branch
    %11 = sbr.rel (0) target = $region9
  $region8: #{batchnorm_forward.1} parent=0 // pred_region
    _
  $region9: #{batchnorm_forward.1} parent=0 // pred_fallthru
    _
  // Predicated region
  $region10: #{batchnorm_forward.1} parent=0 // pred_check
    _
  $region11: #{batchnorm_forward.1} parent=0 // pred_check_branch
    %13 = sbr.rel (0) target = $region13
  $region12: #{batchnorm_forward.1} parent=0 // pred_region
    _
  $region13: #{batchnorm_forward.1} parent=0 // pred_fallthru
    _
  %v14 = vld [vmem:[%s0] sm:$0xf]
  %vm15 = vcmask 1043456
  %v16 = vsel %vm15, %v14, 0.0
  %v17 = vrot.slane %v16, 4
  %v18 = vadd.f32 %v16, %v17
  %v19 = vrot.slane %v18, 2
  %v20 = vadd.f32 %v18, %v19
  %v21 = vrot.slane %v20, 1
  %v22 = vadd.f32 %v20, %v21
  %v23 = vmul.f32 %v14, %v14
  %v24 = vsel %vm15, %v23, 0.0
  %v25 = vrot.slane %v24, 4
  %v26 = vadd.f32 %v24, %v25
  %v27 = vrot.slane %v26, 2
  %v28 = vadd.f32 %v26, %v27
  %v29 = vrot.slane %v28, 1
  %v30 = vadd.f32 %v28, %v29
  %31 = vrot.lane.b32.xlu0 %v22, 32
  %v32 = vpop.permute.xlu0 %31
  %v33 = vadd.f32 %v22, %v32
  %34 = vrot.lane.b32.xlu0 %v30, 32
  %v35 = vpop.permute.xlu0 %34
  %v36 = vadd.f32 %v30, %v35
  %37 = vrot.lane.b32.xlu0 %v33, 64
  %v38 = vpop.permute.xlu0 %37
  %v39 = vadd.f32 %v33, %v38
  %40 = vrot.lane.b32.xlu0 %v36, 64
  %v41 = vpop.permute.xlu0 %40
  %v42 = vadd.f32 %v36, %v41
  %v43 = vmul.f32 %v39, 0.0625
  %v44 = vmul.f32 %v42, 0.0625
  %v45 = vmul.f32 %v43, %v43
  %v46 = vsub.f32 %v44, %v45
  %v47 = vmax.f32 %v46, 0.0
  %v48 = vld [vmem:[%s1] sm:$0x1]
  %v49 = vadd.f32 %v47, 1e-05
  %v50 = vrsqrt.pop %v49
  %v51 = vmul.f32 %v50, %v49
  %v52 = vmul.f32 %v51, %v50
  %v53 = vmul.f32 0.5, %v52
  %v54 = vsub.f32 1.5, %v53
  %v55 = vmul.f32 %v50, %v54
  %vm56 = vweird.f32 %v49
  %vm57 = vweird.f32 %v50
  %vm58 = vmor %vm56, %vm57
  %v59 = vsel %vm58, %v50, %v55
  %v60 = vmul.f32 %v48, %v59
  %v61 = vld [vmem:[%s2] sm:$0x1]
  %v62 = vmul.f32 %v43, %v60
  %v63 = vsub.f32 %v61, %v62
  %v65 = vperm.slane %v60, 0
  %v67 = vmul.f32 %v14, %v65
  %v69 = vperm.slane %v63, 0
  %v71 = vadd.f32 %v67, %v69
  %72 = vst [vmem:[%s3] sm:$0xf] %v71
  // Predicated region
  $region14: #{batchnorm_forward.1} parent=0 // pred_check
    _
  $region15: #{batchnorm_forward.1} parent=0 // pred_check_branch
    %74 = sbr.rel (0) target = $region17
  $region16: #{batchnorm_forward.1} parent=0 // pred_region
    _
  $region17: #{batchnorm_forward.1} parent=0 // pred_fallthru
    _
  // Predicated region
  $region18: #{batchnorm_forward.1} parent=0 // pred_check
    _
  $region19: #{batchnorm_forward.1} parent=0 // pred_check_branch
    %76 = sbr.rel (0) target = $region21
  $region20: #{batchnorm_forward.1} parent=0 // pred_region
    _
  $region21: #{batchnorm_forward.1} parent=0 // pred_fallthru
    _

</llo_original>
